<compile_context>
chip_gen: v5e
topology: v5e:2x2
jax: 0.10.0
libtpu: 0.0.40
codegen_flags: <defaults>
</compile_context>

<pallas_src>
import functools
import math

import jax
import jax.numpy as jnp
import numpy as np
from jax.experimental import pallas as pl
from jax.experimental.pallas import tpu as pltpu  # noqa: F401  (TPU backend)


# ----------------------------------------------------------------------------
# Pallas kernel
# ----------------------------------------------------------------------------
def _predict_atten_kernel(obs_ref, act_ref, wobs_ref, wact_ref, p_ref, s_ref,
                          out_ref, *, n_agents, n_head, embed_dim):
    N, H, E = n_agents, n_head, embed_dim
    HE = H * E
    C = H * N + N                      # useful columns: H*N logits + N attn
    f32 = jnp.float32

    # (1) Fused [selector | key] projection for all heads on the MXU:
    #       proj[:, :HE]  = obs @ W_sel          (selector, query agent)
    #       proj[:, HE:]  = [obs | act] @ W_key  (key, key agent)
    proj = (jnp.dot(obs_ref[...], wobs_ref[...], preferred_element_type=f32) +
            jnp.dot(act_ref[...], wact_ref[...], preferred_element_type=f32))
    sel = proj[:, :HE]                 # (B*N, HE), row = (b, n)
    key = proj[:, HE:]                 # (B*N, HE), row = (b, m)

    # (2) Pair product in a flat, 8-row-multiple, lane-dense layout:
    #       prod[(b, n), m*HE + h*E + e] = sel[(b, n), h*E+e] * key[(b, m), h*E+e]
    #     Row replication key -> key[(b, m)] is a matmul with a constant 0/1
    #     matrix (idle MXU): no sublane-padded (B, N, N, HE) intermediates and
    #     no in-kernel reshapes.
    prod = jnp.concatenate(
        [sel * jnp.dot(p_ref[m], key, preferred_element_type=f32)
         for m in range(N)],
        axis=1)                        # (B*N, N*HE)

    # (3) Per-head logits + head-mean with ONE block-diagonal reduction matmul
    #     (replaces H unaligned 32-lane slices + XLU sums + jnp.stack).
    out_c = jnp.dot(prod, s_ref[...], preferred_element_type=f32)   # (B*N, C)

    # (4) Widen to the full 128-lane output slab with an identity-pad matmul so
    #     the final store is unmasked / full width.
    out_w = out_ref.shape[-1]
    rr = jax.lax.broadcasted_iota(jnp.int32, (C, out_w), 0)
    cc = jax.lax.broadcasted_iota(jnp.int32, (C, out_w), 1)
    eye_pad = (rr == cc).astype(f32)                                 # [I_C | 0]
    packed = jnp.dot(out_c, eye_pad, preferred_element_type=f32)     # (B*N, 128)

    # (5) Softmax over the key-agent axis of the head-mean columns
    #     [H*N, H*N+N), computed in place with a lane mask (masked ops use the
    #     same full vregs anyway) so one full-width store writes everything.
    col = jax.lax.broadcasted_iota(jnp.int32, packed.shape, 1)
    mean_mask = (col >= H * N) & (col < C)
    masked = jnp.where(mean_mask, packed, jnp.float32(-1e30))
    row_max = jnp.max(masked, axis=-1, keepdims=True)
    num = jnp.exp(masked - row_max)            # exactly 0 outside the mask
    denom = jnp.sum(num, axis=-1, keepdims=True)
    # TODO(synk): pl.reciprocal(denom, approx=True) is the EUP fast path but may
    # exceed the 1e-4 test tolerance; keeping the exact reciprocal.
    attn = num * pl.reciprocal(denom, approx=False)
    out_ref[...] = jnp.where(mean_mask, attn, packed)
    # TODO(synk): ret_attn_logits='max' branch not implemented ('mean' only).


# ----------------------------------------------------------------------------
# One-time parameter preparation (hoisted out of the per-call hot path).
# ----------------------------------------------------------------------------
def prepare_params(w_sel, w_key, batch_rows, n_agents):
    """w_sel: (H, E, obs_dim), w_key: (H, E, sa_dim) in nn.Linear (out, in)
    layout with bias=False (hypernet_layers == 1).  batch_rows = bs * t.
    Returns (w_obs, w_act, p_rep, s_red) float32 device arrays."""
    w_sel = np.asarray(w_sel, np.float32)
    w_key = np.asarray(w_key, np.float32)
    H, E, obs_dim = w_sel.shape
    sa_dim = w_key.shape[-1]
    n_actions = sa_dim - obs_dim
    HE = H * E
    N = n_agents
    scale = 1.0 / math.sqrt(E)

    # Head-stacked, transposed projection weights (column h*E + e per half).
    w_sel_t = np.transpose(w_sel, (2, 0, 1)).reshape(obs_dim, HE)
    w_key_t = np.transpose(w_key, (2, 0, 1)).reshape(sa_dim, HE)
    # Fused [selector | key] projection, split by input (obs vs actions), so the
    # wrapper never concatenates obs and actions:
    w_obs = np.concatenate([w_sel_t, w_key_t[:obs_dim]], axis=1)      # (obs_dim, 2HE)
    w_act = np.concatenate([np.zeros((n_actions, HE), np.float32),
                            w_key_t[obs_dim:]], axis=1)               # (n_act, 2HE)

    # Row-replication matrices: (p_rep[m] @ key)[(b, n), :] == key[(b, m), :].
    rows = batch_rows * N
    p_rep = np.zeros((N, rows, rows), np.float32)
    for m in range(N):
        for b in range(batch_rows):
            p_rep[m, b * N:(b + 1) * N, b * N + m] = 1.0

    # Block-diagonal head-reduction matrix:
    #   col h*N + m : scale   * sum_e  prod[., m*HE + h*E + e]   (head logits)
    #   col H*N + m : scale/H * sum_he prod[., m*HE + h*E + e]   (head mean)
    C = H * N + N
    s_red = np.zeros((N * HE, C), np.float32)
    for m in range(N):
        for h in range(H):
            r0 = m * HE + h * E
            s_red[r0:r0 + E, h * N + m] = scale
            s_red[r0:r0 + E, H * N + m] = scale / H

    return (jnp.asarray(w_obs), jnp.asarray(w_act),
            jnp.asarray(p_rep), jnp.asarray(s_red))


# ----------------------------------------------------------------------------
# Forward wrapper.
# ----------------------------------------------------------------------------
def predict_atten_forward(obs, actions, params, n_head, embed_dim, bs):
    """obs: (bs*t, N, obs_dim), actions: (bs*t, N, n_actions)."""
    w_obs, w_act, p_rep, s_red = params
    B, N, obs_dim = obs.shape
    n_actions = actions.shape[-1]
    H, E = n_head, embed_dim
    C = H * N + N
    out_w = 128 * ((C + 127) // 128)       # lane-dense packed output width

    obs2d = obs.reshape(B * N, obs_dim).astype(jnp.float32)
    act2d = actions.reshape(B * N, n_actions).astype(jnp.float32)

    kernel = functools.partial(_predict_atten_kernel,
                               n_agents=N, n_head=H, embed_dim=E)

    rows = B * N
    flops = 2 * rows * (obs_dim + n_actions) * 2 * H * E        # projection
    flops += 2 * N * rows * rows * H * E                        # key replication
    flops += 2 * rows * (N * H * E) * C                         # head reduction
    flops += 2 * rows * C * out_w                               # identity pad
    bytes_accessed = 4 * (obs2d.size + act2d.size + int(w_obs.size)
                          + int(w_act.size) + int(p_rep.size) + int(s_red.size)
                          + rows * out_w)

    packed = pl.pallas_call(
        kernel,
        out_shape=jax.ShapeDtypeStruct((rows, out_w), jnp.float32),
        cost_estimate=pl.CostEstimate(flops=int(flops),
                                      transcendentals=int(rows * out_w),
                                      bytes_accessed=int(bytes_accessed)),
    )(obs2d, act2d, w_obs, w_act, p_rep, s_red)

    # Pure layout plumbing on ~5 KiB, outside the kernel:
    logits_flat = packed[:, :H * N]        # flat element order (b, n, h, m)
    attn_flat = packed[:, H * N:C]         # flat element order (b, n, m)

    # Mirrors the PyTorch code verbatim:
    #   head_attend_logits.reshape(bs, -1, N, N)[:, 1:]
    #   attn_logits_weight.reshape(bs, -1, N, N)[:, 1:]
    # logits_flat has exactly the flat element order of torch's (B, N, H, N)
    # tensor, so this reproduces torch's semantics (including its head/agent
    # interleaving in the reshape and the [:, 1:] slice).
    head_out = logits_flat.reshape(bs, -1, N, N)[:, 1:]
    attn_out = attn_flat.reshape(bs, -1, N, N)[:, 1:]
    return head_out, attn_out


# ----------------------------------------------------------------------------
# Glue (plain JAX): PredictAtten.build_input with obs_last_action/obs_agent_id.
# ----------------------------------------------------------------------------
def build_input(obs_batch, actions_onehot, t, obs_last_action=True, obs_agent_id=True):
    bs, _, n_agents, _ = obs_batch.shape
    inputs = [obs_batch[:, :t]]
    if obs_last_action:
        last = jnp.zeros_like(actions_onehot[:, :t])
        last = last.at[:, 1:].set(actions_onehot[:, : t - 1])
        inputs.append(last)
    if obs_agent_id:
        eye = jnp.eye(n_agents, dtype=obs_batch.dtype).reshape(1, 1, n_agents, n_agents)
        inputs.append(jnp.broadcast_to(eye, (bs, t, n_agents, n_agents)))
    obs = jnp.concatenate([x.reshape(bs * t, n_agents, -1) for x in inputs], axis=2)
    actions = actions_onehot[:, :t].reshape(bs * t, n_agents, -1)
    return obs, actions


# Pure-JAX reference for correctness checking.
def _reference(obs, actions, w_sel, w_key, bs, t):
    B, N, _ = obs.shape
    H, E, _ = w_sel.shape
    sa = jnp.concatenate([obs, actions], axis=-1)
    heads = []
    for h in range(H):
        sel = obs @ w_sel[h].T                       # (B, N, E)
        key = sa @ w_key[h].T                        # (B, N, E)
        heads.append(jnp.einsum('bne,bme->bnm', sel, key))
    head_logits = jnp.stack(heads, axis=-2) / math.sqrt(E)   # (B, N, H, N)
    attn = jax.nn.softmax(head_logits.mean(axis=-2), axis=-1)
    return (head_logits.reshape(bs, -1, N, N)[:, 1:],
            attn.reshape(bs, -1, N, N)[:, 1:])


if __name__ == "__main__":
    # Small, PredictAtten-consistent config.
    bs, T, t = 2, 8, 8
    n_agents, obs_feat, n_actions = 4, 10, 5
    n_head, embed_dim = 4, 32
    obs_dim = obs_feat + n_actions + n_agents     # + obs_last_action + obs_agent_id
    sa_dim = obs_dim + n_actions

    key = jax.random.PRNGKey(0)
    k1, k2, k3, k4 = jax.random.split(key, 4)

    obs_batch = jax.random.normal(k1, (bs, T, n_agents, obs_feat), dtype=jnp.float32)
    act_idx = jax.random.randint(k2, (bs, T, n_agents), 0, n_actions)
    actions_onehot = jax.nn.one_hot(act_idx, n_actions, dtype=jnp.float32)

    # nn.Linear weights, (out, in) layout, bias=False (hypernet_layers == 1).
    # TODO(synk): hypernet_layers == 2 (MLP extractors) variant not implemented.
    w_sel = 0.1 * jax.random.normal(k3, (n_head, embed_dim, obs_dim), dtype=jnp.float32)
    w_key = 0.1 * jax.random.normal(k4, (n_head, embed_dim, sa_dim), dtype=jnp.float32)

    obs, actions = build_input(obs_batch, actions_onehot, t)
    B = bs * t

    # One-time parameter preparation (outside the forward hot path).
    params = jax.block_until_ready(
        prepare_params(w_sel, w_key, batch_rows=B, n_agents=n_agents))

    head_out, attn_out = predict_atten_forward(
        obs, actions, params, n_head, embed_dim, bs)
    jax.block_until_ready((head_out, attn_out))

    ref_head, ref_attn = _reference(obs, actions, w_sel, w_key, bs, t)
    np.testing.assert_allclose(np.asarray(head_out), np.asarray(ref_head),
                               rtol=1e-4, atol=1e-4)
    np.testing.assert_allclose(np.asarray(attn_out), np.asarray(ref_attn),
                               rtol=1e-4, atol=1e-4)

    print("KERNEL_OK")
</pallas_src>

<mosaic_0001>
module attributes {stable_mosaic.version = 11 : i64} {
  func.func @_predict_atten_kernel(%arg0: memref<64x19xf32, #tpu.memory_space<vmem>>, %arg1: memref<64x5xf32, #tpu.memory_space<vmem>>, %arg2: memref<19x256xf32, #tpu.memory_space<vmem>>, %arg3: memref<5x256xf32, #tpu.memory_space<vmem>>, %arg4: memref<4x64x64xf32, #tpu.memory_space<vmem>>, %arg5: memref<512x20xf32, #tpu.memory_space<vmem>>, %arg6: memref<64x128xf32, #tpu.memory_space<vmem>>) attributes {dimension_semantics = [], scalar_prefetch = 0 : i64, scratch_operands = 0 : i64, tpu.core_type = #tpu.core_type<tc>} {
    %c0 = arith.constant 0 : index
    %c0_0 = arith.constant 0 : index
    %0 = vector.load %arg0[%c0, %c0_0] : memref<64x19xf32, #tpu.memory_space<vmem>>, vector<64x19xf32>
    %c0_1 = arith.constant 0 : index
    %c0_2 = arith.constant 0 : index
    %1 = vector.load %arg2[%c0_1, %c0_2] : memref<19x256xf32, #tpu.memory_space<vmem>>, vector<19x256xf32>
    %cst = arith.constant dense<0.000000e+00> : vector<64x256xf32>
    %2 = tpu.matmul %0, %1, %cst {dimension_numbers = #tpu.dot_dimension_numbers<[1], [0], [0], [1], [0, 0, 1, 1], [], []>} : vector<64x19xf32>, vector<19x256xf32>, vector<64x256xf32> -> vector<64x256xf32>
    %c0_3 = arith.constant 0 : index
    %c0_4 = arith.constant 0 : index
    %3 = vector.load %arg1[%c0_3, %c0_4] : memref<64x5xf32, #tpu.memory_space<vmem>>, vector<64x5xf32>
    %c0_5 = arith.constant 0 : index
    %c0_6 = arith.constant 0 : index
    %4 = vector.load %arg3[%c0_5, %c0_6] : memref<5x256xf32, #tpu.memory_space<vmem>>, vector<5x256xf32>
    %cst_7 = arith.constant dense<0.000000e+00> : vector<64x256xf32>
    %5 = tpu.matmul %3, %4, %cst_7 {dimension_numbers = #tpu.dot_dimension_numbers<[1], [0], [0], [1], [0, 0, 1, 1], [], []>} : vector<64x5xf32>, vector<5x256xf32>, vector<64x256xf32> -> vector<64x256xf32>
    %6 = arith.addf %2, %5 : vector<64x256xf32>
    %7 = vector.extract_strided_slice %6 {offsets = [0, 0], sizes = [64, 128], strides = [1, 1]} : vector<64x256xf32> to vector<64x128xf32>
    %8 = vector.extract_strided_slice %6 {offsets = [0, 128], sizes = [64, 128], strides = [1, 1]} : vector<64x256xf32> to vector<64x128xf32>
    %c0_8 = arith.constant 0 : index
    %c0_9 = arith.constant 0 : index
    %c0_10 = arith.constant 0 : index
    %9 = vector.load %arg4[%c0_8, %c0_9, %c0_10] : memref<4x64x64xf32, #tpu.memory_space<vmem>>, vector<1x64x64xf32>
    %10 = vector.shape_cast %9 : vector<1x64x64xf32> to vector<64x64xf32>
    %cst_11 = arith.constant dense<0.000000e+00> : vector<64x128xf32>
    %11 = tpu.matmul %10, %8, %cst_11 {dimension_numbers = #tpu.dot_dimension_numbers<[1], [0], [0], [1], [0, 0, 1, 1], [], []>} : vector<64x64xf32>, vector<64x128xf32>, vector<64x128xf32> -> vector<64x128xf32>
    %12 = arith.mulf %7, %11 : vector<64x128xf32>
    %c1 = arith.constant 1 : index
    %c0_12 = arith.constant 0 : index
    %c0_13 = arith.constant 0 : index
    %13 = vector.load %arg4[%c1, %c0_12, %c0_13] : memref<4x64x64xf32, #tpu.memory_space<vmem>>, vector<1x64x64xf32>
    %14 = vector.shape_cast %13 : vector<1x64x64xf32> to vector<64x64xf32>
    %cst_14 = arith.constant dense<0.000000e+00> : vector<64x128xf32>
    %15 = tpu.matmul %14, %8, %cst_14 {dimension_numbers = #tpu.dot_dimension_numbers<[1], [0], [0], [1], [0, 0, 1, 1], [], []>} : vector<64x64xf32>, vector<64x128xf32>, vector<64x128xf32> -> vector<64x128xf32>
    %16 = arith.mulf %7, %15 : vector<64x128xf32>
    %c2 = arith.constant 2 : index
    %c0_15 = arith.constant 0 : index
    %c0_16 = arith.constant 0 : index
    %17 = vector.load %arg4[%c2, %c0_15, %c0_16] : memref<4x64x64xf32, #tpu.memory_space<vmem>>, vector<1x64x64xf32>
    %18 = vector.shape_cast %17 : vector<1x64x64xf32> to vector<64x64xf32>
    %cst_17 = arith.constant dense<0.000000e+00> : vector<64x128xf32>
    %19 = tpu.matmul %18, %8, %cst_17 {dimension_numbers = #tpu.dot_dimension_numbers<[1], [0], [0], [1], [0, 0, 1, 1], [], []>} : vector<64x64xf32>, vector<64x128xf32>, vector<64x128xf32> -> vector<64x128xf32>
    %20 = arith.mulf %7, %19 : vector<64x128xf32>
    %c3 = arith.constant 3 : index
    %c0_18 = arith.constant 0 : index
    %c0_19 = arith.constant 0 : index
    %21 = vector.load %arg4[%c3, %c0_18, %c0_19] : memref<4x64x64xf32, #tpu.memory_space<vmem>>, vector<1x64x64xf32>
    %22 = vector.shape_cast %21 : vector<1x64x64xf32> to vector<64x64xf32>
    %cst_20 = arith.constant dense<0.000000e+00> : vector<64x128xf32>
    %23 = tpu.matmul %22, %8, %cst_20 {dimension_numbers = #tpu.dot_dimension_numbers<[1], [0], [0], [1], [0, 0, 1, 1], [], []>} : vector<64x64xf32>, vector<64x128xf32>, vector<64x128xf32> -> vector<64x128xf32>
    %24 = arith.mulf %7, %23 : vector<64x128xf32>
    %25 = tpu.concatenate %12, %16, %20, %24 in 1 : vector<64x128xf32>, vector<64x128xf32>, vector<64x128xf32>, vector<64x128xf32> -> vector<64x512xf32>
    %c0_21 = arith.constant 0 : index
    %c0_22 = arith.constant 0 : index
    %26 = vector.load %arg5[%c0_21, %c0_22] : memref<512x20xf32, #tpu.memory_space<vmem>>, vector<512x20xf32>
    %cst_23 = arith.constant dense<0.000000e+00> : vector<64x20xf32>
    %27 = tpu.matmul %25, %26, %cst_23 {dimension_numbers = #tpu.dot_dimension_numbers<[1], [0], [0], [1], [0, 0, 1, 1], [], []>} : vector<64x512xf32>, vector<512x20xf32>, vector<64x20xf32> -> vector<64x20xf32>
    %28 = tpu.iota {dimensions = array<i32: 0>} : vector<20x128xi32>
    %29 = tpu.iota {dimensions = array<i32: 1>} : vector<20x128xi32>
    %30 = arith.cmpi eq, %28, %29 : vector<20x128xi32>
    %31 = arith.extui %30 : vector<20x128xi1> to vector<20x128xi32>
    %32 = arith.sitofp %31 : vector<20x128xi32> to vector<20x128xf32>
    %cst_24 = arith.constant dense<0.000000e+00> : vector<64x128xf32>
    %33 = tpu.matmul %27, %32, %cst_24 {dimension_numbers = #tpu.dot_dimension_numbers<[1], [0], [0], [1], [0, 0, 1, 1], [], []>} : vector<64x20xf32>, vector<20x128xf32>, vector<64x128xf32> -> vector<64x128xf32>
    %34 = tpu.iota {dimensions = array<i32: 1>} : vector<64x128xi32>
    %c16_i32 = arith.constant 16 : i32
    %35 = vector.broadcast %c16_i32 : i32 to vector<64x128xi32>
    %36 = arith.cmpi sge, %34, %35 : vector<64x128xi32>
    %c20_i32 = arith.constant 20 : i32
    %37 = vector.broadcast %c20_i32 : i32 to vector<64x128xi32>
    %38 = arith.cmpi slt, %34, %37 : vector<64x128xi32>
    %39 = arith.andi %36, %38 : vector<64x128xi1>
    %cst_25 = arith.constant -1.000000e+30 : f32
    %40 = vector.broadcast %cst_25 : f32 to vector<64x128xf32>
    %41 = arith.select %39, %33, %40 : vector<64x128xi1>, vector<64x128xf32>
    %cst_26 = arith.constant dense<0xFF800000> : vector<64xf32>
    %42 = vector.multi_reduction <maximumf>, %41, %cst_26 [1] : vector<64x128xf32> to vector<64xf32>
    %43 = vector.shape_cast %42 : vector<64xf32> to vector<64x1xf32>
    %44 = vector.broadcast %43 : vector<64x1xf32> to vector<64x128xf32>
    %45 = arith.subf %41, %44 : vector<64x128xf32>
    %46 = math.exp %45 : vector<64x128xf32>
    %cst_27 = arith.constant dense<0.000000e+00> : vector<64xf32>
    %47 = vector.multi_reduction <add>, %46, %cst_27 [1] : vector<64x128xf32> to vector<64xf32>
    %48 = vector.shape_cast %47 : vector<64xf32> to vector<64x1xf32>
    %49 = tpu.reciprocal %48 : vector<64x1xf32> -> vector<64x1xf32>
    %50 = vector.broadcast %49 : vector<64x1xf32> to vector<64x128xf32>
    %51 = arith.mulf %46, %50 : vector<64x128xf32>
    %52 = arith.select %39, %51, %33 : vector<64x128xi1>, vector<64x128xf32>
    %c0_28 = arith.constant 0 : index
    %c0_29 = arith.constant 0 : index
    %53 = vector.load %arg6[%c0_28, %c0_29] : memref<64x128xf32, #tpu.memory_space<vmem>>, vector<64x128xf32>
    tpu.vector_store %arg6[%c0_28, %c0_29], %52 {strides = array<i32>} : memref<64x128xf32, #tpu.memory_space<vmem>>, vector<64x128xf32>,
    return
  }
}

</mosaic_0001>

<llo_original>
// kernel: tpu_custom_call.1
$region0: #{tpu_custom_call.1}
  #allocation0 [shape = 'u32[]', space=smem, size = 0x4, offset = 0x4, fixed_abs, tag = 'smem constant byte address 0x4 - core index']
  #allocation1 [shape = 'u32[72,128]{1,0:T(1,128)}', space=vmem, size = 0x9000, scoped, tag = 'internal scratch']
  %s0 = inlined_call_operand.vmem [shape: f32[64,19], index: 0, kind: input, shape index: {}]
  %s1 = inlined_call_operand.vmem [shape: f32[64,5], index: 1, kind: input, shape index: {}]
  %s2 = inlined_call_operand.vmem [shape: f32[19,256], index: 2, kind: input, shape index: {}]
  %s3 = inlined_call_operand.vmem [shape: f32[5,256], index: 3, kind: input, shape index: {}]
  %s4 = inlined_call_operand.vmem [shape: f32[4,64,64], index: 4, kind: input, shape index: {}]
  %s5 = inlined_call_operand.vmem [shape: f32[512,20], index: 5, kind: input, shape index: {}]
  %s6 = inlined_call_operand.hbm [shape: f32[64,128], index: 6, kind: output, shape index: {}]
  %s7 = sld [smem:[#allocation0]]
  $region34: #{tpu_custom_call.1} parent=0
    _
  %s9 = ssub.s32 1, %s7
  %s10 = scalar_select 0, %s9, %s7
  $region1: #{tpu_custom_call.1} parent=0
    #allocation2 [shape = 'u8[32768]{0}', space=vmem, size = 0x8000, scoped, tag = 'output window, operand 0, single buffered']
    #allocation3 [shape = 's32[1]{0}', space=sflag, size = 0x4, scoped, tag = 'scoped memory for tpu_custom_call.1']
    %11 = vsyncpa [#allocation3], 0
    // Predicated region
    $region2: #{tpu_custom_call.1} parent=1 // pred_check
      _
    $region3: #{tpu_custom_call.1} parent=1 // pred_check_branch
      %13 = sbr.rel (0) target = $region5
    $region4: #{tpu_custom_call.1} parent=1 // pred_region
      _
    $region5: #{tpu_custom_call.1} parent=1 // pred_fallthru
      _
    // Predicated region
    $region6: #{tpu_custom_call.1} parent=1 // pred_check
      _
    $region7: #{tpu_custom_call.1} parent=1 // pred_check_branch
      %15 = sbr.rel (0) target = $region9
    $region8: #{tpu_custom_call.1} parent=1 // pred_region
      _
    $region9: #{tpu_custom_call.1} parent=1 // pred_fallthru
      _
    // Predicated region
    $region10: #{tpu_custom_call.1} parent=1 // pred_check
      _
    $region11: #{tpu_custom_call.1} parent=1 // pred_check_branch
      %17 = sbr.rel (0) target = $region13
    $region12: #{tpu_custom_call.1} parent=1 // pred_region
      _
    $region13: #{tpu_custom_call.1} parent=1 // pred_fallthru
      _
    // Predicated region
    $region14: #{tpu_custom_call.1} parent=1 // pred_check
      _
    $region15: #{tpu_custom_call.1} parent=1 // pred_check_branch
      %19 = sbr.rel (0) target = $region17
    $region16: #{tpu_custom_call.1} parent=1 // pred_region
      _
    $region17: #{tpu_custom_call.1} parent=1 // pred_fallthru
      _
    // Predicated region
    $region18: #{tpu_custom_call.1} parent=1 // pred_check
      _
    $region19: #{tpu_custom_call.1} parent=1 // pred_check_branch
      %21 = sbr.rel (0) target = $region21
    $region20: #{tpu_custom_call.1} parent=1 // pred_region
      _
    $region21: #{tpu_custom_call.1} parent=1 // pred_fallthru
      _
    // Predicated region
    $region22: #{tpu_custom_call.1} parent=1 // pred_check
      _
    $region23: #{tpu_custom_call.1} parent=1 // pred_check_branch
      %23 = sbr.rel (0) target = $region25
    $region24: #{tpu_custom_call.1} parent=1 // pred_region
      _
    $region25: #{tpu_custom_call.1} parent=1 // pred_fallthru
      _
    %v24 = vld [vmem:[%s0] sm:$0xff]
    %v25 = vld [vmem:[%s0 + $0x8] sm:$0xff]
    %v26 = vld [vmem:[%s0 + $0x10] sm:$0xff]
    %v27 = vld [vmem:[%s0 + $0x18] sm:$0xff]
    %v28 = vld [vmem:[%s0 + $0x20] sm:$0xff]
    %v29 = vld [vmem:[%s0 + $0x28] sm:$0xff]
    %v30 = vld [vmem:[%s0 + $0x30] sm:$0xff]
    %v31 = vld [vmem:[%s0 + $0x38] sm:$0xff]
    %v32 = vld [vmem:[%s2] sm:$0xff]
    %v33 = vld [vmem:[%s2 + $0x8] sm:$0xff]
    %v34 = vld [vmem:[%s2 + $0x10] sm:$0xff]
    %v35 = vld [vmem:[%s2 + $0x18] sm:$0xff]
    %v36 = vld [vmem:[%s2 + $0x20] sm:$0x7]
    %v37 = vld [vmem:[%s2 + $0x28] sm:$0x7]
    %v38 = vld [vmem:[%s1] sm:$0xff]
    %v39 = vld [vmem:[%s1 + $0x8] sm:$0xff]
    %v40 = vld [vmem:[%s1 + $0x10] sm:$0xff]
    %v41 = vld [vmem:[%s1 + $0x18] sm:$0xff]
    %v42 = vld [vmem:[%s1 + $0x20] sm:$0xff]
    %v43 = vld [vmem:[%s1 + $0x28] sm:$0xff]
    %v44 = vld [vmem:[%s1 + $0x30] sm:$0xff]
    %v45 = vld [vmem:[%s1 + $0x38] sm:$0xff]
    %v46 = vld [vmem:[%s3] sm:$0x1f]
    %v47 = vld [vmem:[%s3 + $0x8] sm:$0x1f]
    %vm48 = vcmask 39936
    %v50 = vsel %vm48, %v38, 0
    %v53 = vsel %vm48, %v39, 0
    %v56 = vsel %vm48, %v40, 0
    %v59 = vsel %vm48, %v41, 0
    %v62 = vsel %vm48, %v42, 0
    %v65 = vsel %vm48, %v43, 0
    %v68 = vsel %vm48, %v44, 0
    %v71 = vsel %vm48, %v45, 0
    %vm73 = vcmask 1044480
    %v75 = vsel %vm73, %v46, 0
    %v78 = vsel %vm73, %v47, 0
    %80 = vmatpush.msra.mxu0 0.0
    %81 = vmatpush.msra.mxu0 0.0
    %82 = vmatpush.msra.mxu0 0.0
    %83 = vmatpush.msra.mxu0 0.0
    %84 = vmatpush.msra.mxu0 0.0
    %85 = vmatpush.msra.mxu0 0.0
    %86 = vmatpush.msra.mxu0 0.0
    %87 = vmatpush.msra.mxu0 0.0
    %88 = vmatpush.msra.mxu0 0.0
    %89 = vmatpush.msra.mxu0 0.0
    %90 = vmatpush.msra.mxu0 0.0
    %91 = vmatpush.msra.mxu0 0.0
    %92 = vmatpush.msra.mxu0 0.0
    %93 = vmatpush.msra.mxu0 0.0
    %94 = vmatpush.msra.mxu0 0.0
    %95 = vmatpush.msra.mxu0 %v75
    %96 = vmatmul.f32.gmra.mxu0 %v50
    %v97 = vpop.f32.mrf.mxu0
    %v98 = vadd.f32 0.0, %v97
    %99 = vmatmul.f32.gmra.mxu0 %v53
    %v100 = vpop.f32.mrf.mxu0
    %v101 = vadd.f32 0.0, %v100
    %102 = vmatmul.f32.gmra.mxu0 %v56
    %v103 = vpop.f32.mrf.mxu0
    %v104 = vadd.f32 0.0, %v103
    %105 = vmatmul.f32.gmra.mxu0 %v59
    %v106 = vpop.f32.mrf.mxu0
    %v107 = vadd.f32 0.0, %v106
    %108 = vmatmul.f32.gmra.mxu0 %v62
    %v109 = vpop.f32.mrf.mxu0
    %v110 = vadd.f32 0.0, %v109
    %111 = vmatmul.f32.gmra.mxu0 %v65
    %v112 = vpop.f32.mrf.mxu0
    %v113 = vadd.f32 0.0, %v112
    %114 = vmatmul.f32.gmra.mxu0 %v68
    %v115 = vpop.f32.mrf.mxu0
    %v116 = vadd.f32 0.0, %v115
    %117 = vmatmul.f32.gmra.mxu0 %v71
    %v118 = vpop.f32.mrf.mxu0
    %v119 = vadd.f32 0.0, %v118
    %120 = vdwg.mxu0
    %121 = vmatpush.msra.mxu0 0.0
    %122 = vmatpush.msra.mxu0 0.0
    %123 = vmatpush.msra.mxu0 0.0
    %124 = vmatpush.msra.mxu0 0.0
    %125 = vmatpush.msra.mxu0 0.0
    %126 = vmatpush.msra.mxu0 0.0
    %127 = vmatpush.msra.mxu0 0.0
    %128 = vmatpush.msra.mxu0 0.0
    %129 = vmatpush.msra.mxu0 0.0
    %130 = vmatpush.msra.mxu0 0.0
    %131 = vmatpush.msra.mxu0 0.0
    %132 = vmatpush.msra.mxu0 0.0
    %133 = vmatpush.msra.mxu0 0.0
    %134 = vmatpush.msra.mxu0 0.0
    %135 = vmatpush.msra.mxu0 0.0
    %136 = vmatpush.msra.mxu0 %v78
    %137 = vmatmul.f32.gmra.mxu0 %v50
    %v138 = vpop.f32.mrf.mxu0
    %v139 = vadd.f32 0.0, %v138
    %140 = vmatmul.f32.gmra.mxu0 %v53
    %v141 = vpop.f32.mrf.mxu0
    %v142 = vadd.f32 0.0, %v141
    %143 = vmatmul.f32.gmra.mxu0 %v56
    %v144 = vpop.f32.mrf.mxu0
    %v145 = vadd.f32 0.0, %v144
    %146 = vmatmul.f32.gmra.mxu0 %v59
    %v147 = vpop.f32.mrf.mxu0
    %v148 = vadd.f32 0.0, %v147
    %149 = vmatmul.f32.gmra.mxu0 %v62
    %v150 = vpop.f32.mrf.mxu0
    %v151 = vadd.f32 0.0, %v150
    %152 = vmatmul.f32.gmra.mxu0 %v65
    %v153 = vpop.f32.mrf.mxu0
    %v154 = vadd.f32 0.0, %v153
    %155 = vmatmul.f32.gmra.mxu0 %v68
    %v156 = vpop.f32.mrf.mxu0
    %v157 = vadd.f32 0.0, %v156
    %158 = vmatmul.f32.gmra.mxu0 %v71
    %v159 = vpop.f32.mrf.mxu0
    %v160 = vadd.f32 0.0, %v159
    %161 = vdwg.mxu0
    %vm162 = vcmask 154624
    %v164 = vsel %vm162, %v24, 0
    %v167 = vsel %vm162, %v25, 0
    %v170 = vsel %vm162, %v26, 0
    %v173 = vsel %vm162, %v27, 0
    %v176 = vsel %vm162, %v28, 0
    %v179 = vsel %vm162, %v29, 0
    %v182 = vsel %vm162, %v30, 0
    %v185 = vsel %vm162, %v31, 0
    %vm187 = vcmask 1042432
    %v189 = vsel %vm187, %v36, 0
    %v192 = vsel %vm187, %v37, 0
    %194 = vmatpush.msra.mxu0 0.0
    %195 = vmatpush.msra.mxu0 0.0
    %196 = vmatpush.msra.mxu0 0.0
    %197 = vmatpush.msra.mxu0 0.0
    %198 = vmatpush.msra.mxu0 0.0
    %199 = vmatpush.msra.mxu0 0.0
    %200 = vmatpush.msra.mxu0 0.0
    %201 = vmatpush.msra.mxu0 0.0
    %202 = vmatpush.msra.mxu0 0.0
    %203 = vmatpush.msra.mxu0 0.0
    %204 = vmatpush.msra.mxu0 0.0
    %205 = vmatpush.msra.mxu0 0.0
    %206 = vmatpush.msra.mxu0 0.0
    %207 = vmatpush.msra.mxu0 %v189
    %208 = vmatpush.msra.mxu0 %v34
    %209 = vmatpush.msra.mxu0 %v32
    %210 = vmatmul.f32.gmra.mxu0 %v164
    %v211 = vpop.f32.mrf.mxu0
    %v212 = vadd.f32 %v98, %v211
    %213 = vmatmul.f32.gmra.mxu0 %v167
    %v214 = vpop.f32.mrf.mxu0
    %v215 = vadd.f32 %v101, %v214
    %216 = vmatmul.f32.gmra.mxu0 %v170
    %v217 = vpop.f32.mrf.mxu0
    %v218 = vadd.f32 %v104, %v217
    %219 = vmatmul.f32.gmra.mxu0 %v173
    %v220 = vpop.f32.mrf.mxu0
    %v221 = vadd.f32 %v107, %v220
    %222 = vmatmul.f32.gmra.mxu0 %v176
    %v223 = vpop.f32.mrf.mxu0
    %v224 = vadd.f32 %v110, %v223
    %225 = vmatmul.f32.gmra.mxu0 %v179
    %v226 = vpop.f32.mrf.mxu0
    %v227 = vadd.f32 %v113, %v226
    %228 = vmatmul.f32.gmra.mxu0 %v182
    %v229 = vpop.f32.mrf.mxu0
    %v230 = vadd.f32 %v116, %v229
    %231 = vmatmul.f32.gmra.mxu0 %v185
    %v232 = vpop.f32.mrf.mxu0
    %v233 = vadd.f32 %v119, %v232
    %234 = vdwg.mxu0
    %235 = vmatpush.msra.mxu0 0.0
    %236 = vmatpush.msra.mxu0 0.0
    %237 = vmatpush.msra.mxu0 0.0
    %238 = vmatpush.msra.mxu0 0.0
    %239 = vmatpush.msra.mxu0 0.0
    %240 = vmatpush.msra.mxu0 0.0
    %241 = vmatpush.msra.mxu0 0.0
    %242 = vmatpush.msra.mxu0 0.0
    %243 = vmatpush.msra.mxu0 0.0
    %244 = vmatpush.msra.mxu0 0.0
    %245 = vmatpush.msra.mxu0 0.0
    %246 = vmatpush.msra.mxu0 0.0
    %247 = vmatpush.msra.mxu0 0.0
    %248 = vmatpush.msra.mxu0 %v192
    %249 = vmatpush.msra.mxu0 %v35
    %250 = vmatpush.msra.mxu0 %v33
    %251 = vmatmul.f32.gmra.mxu0 %v164
    %v252 = vpop.f32.mrf.mxu0
    %v253 = vadd.f32 %v139, %v252
    %254 = vmatmul.f32.gmra.mxu0 %v167
    %v255 = vpop.f32.mrf.mxu0
    %v256 = vadd.f32 %v142, %v255
    %257 = vmatmul.f32.gmra.mxu0 %v170
    %v258 = vpop.f32.mrf.mxu0
    %v259 = vadd.f32 %v145, %v258
    %260 = vmatmul.f32.gmra.mxu0 %v173
    %v261 = vpop.f32.mrf.mxu0
    %v262 = vadd.f32 %v148, %v261
    %263 = vmatmul.f32.gmra.mxu0 %v176
    %v264 = vpop.f32.mrf.mxu0
    %v265 = vadd.f32 %v151, %v264
    %266 = vmatmul.f32.gmra.mxu0 %v179
    %v267 = vpop.f32.mrf.mxu0
    %v268 = vadd.f32 %v154, %v267
    %269 = vmatmul.f32.gmra.mxu0 %v182
    %v270 = vpop.f32.mrf.mxu0
    %v271 = vadd.f32 %v157, %v270
    %272 = vmatmul.f32.gmra.mxu0 %v185
    %v273 = vpop.f32.mrf.mxu0
    %v274 = vadd.f32 %v160, %v273
    %275 = vdwg.mxu0
    %v276 = vld [vmem:[%s4] sm:$0xff]
    %v277 = vld [vmem:[%s4 + $0x8] sm:$0xff]
    %v278 = vld [vmem:[%s4 + $0x10] sm:$0xff]
    %v279 = vld [vmem:[%s4 + $0x18] sm:$0xff]
    %v280 = vld [vmem:[%s4 + $0x20] sm:$0xff]
    %v281 = vld [vmem:[%s4 + $0x28] sm:$0xff]
    %v282 = vld [vmem:[%s4 + $0x30] sm:$0xff]
    %v283 = vld [vmem:[%s4 + $0x38] sm:$0xff]
    %vm284 = vcmask 523264
    %v286 = vsel %vm284, %v276, 0
    %v289 = vsel %vm284, %v277, 0
    %v292 = vsel %vm284, %v278, 0
    %v295 = vsel %vm284, %v279, 0
    %v298 = vsel %vm284, %v280, 0
    %v301 = vsel %vm284, %v281, 0
    %v304 = vsel %vm284, %v282, 0
    %v307 = vsel %vm284, %v283, 0
    %309 = vmatpush.msra.mxu0 0.0
    %310 = vmatpush.msra.mxu0 0.0
    %311 = vmatpush.msra.mxu0 0.0
    %312 = vmatpush.msra.mxu0 0.0
    %313 = vmatpush.msra.mxu0 0.0
    %314 = vmatpush.msra.mxu0 0.0
    %315 = vmatpush.msra.mxu0 0.0
    %316 = vmatpush.msra.mxu0 0.0
    %317 = vmatpush.msra.mxu0 %v274
    %318 = vmatpush.msra.mxu0 %v271
    %319 = vmatpush.msra.mxu0 %v268
    %320 = vmatpush.msra.mxu0 %v265
    %321 = vmatpush.msra.mxu0 %v262
    %322 = vmatpush.msra.mxu0 %v259
    %323 = vmatpush.msra.mxu0 %v256
    %324 = vmatpush.msra.mxu0 %v253
    %325 = vmatmul.f32.gmra.mxu0 %v286
    %v326 = vpop.f32.mrf.mxu0
    %v327 = vadd.f32 0.0, %v326
    %328 = vmatmul.f32.gmra.mxu0 %v289
    %v329 = vpop.f32.mrf.mxu0
    %v330 = vadd.f32 0.0, %v329
    %331 = vmatmul.f32.gmra.mxu0 %v292
    %v332 = vpop.f32.mrf.mxu0
    %v333 = vadd.f32 0.0, %v332
    %334 = vmatmul.f32.gmra.mxu0 %v295
    %v335 = vpop.f32.mrf.mxu0
    %v336 = vadd.f32 0.0, %v335
    %337 = vmatmul.f32.gmra.mxu0 %v298
    %v338 = vpop.f32.mrf.mxu0
    %v339 = vadd.f32 0.0, %v338
    %340 = vmatmul.f32.gmra.mxu0 %v301
    %v341 = vpop.f32.mrf.mxu0
    %v342 = vadd.f32 0.0, %v341
    %343 = vmatmul.f32.gmra.mxu0 %v304
    %v344 = vpop.f32.mrf.mxu0
    %v345 = vadd.f32 0.0, %v344
    %346 = vmatmul.f32.gmra.mxu0 %v307
    %v347 = vpop.f32.mrf.mxu0
    %v348 = vadd.f32 0.0, %v347
    %349 = vdwg.mxu0
    %v350 = vmul.f32 %v212, %v327
    %v351 = vmul.f32 %v215, %v330
    %v352 = vmul.f32 %v218, %v333
    %v353 = vmul.f32 %v221, %v336
    %v354 = vmul.f32 %v224, %v339
    %v355 = vmul.f32 %v227, %v342
    %v356 = vmul.f32 %v230, %v345
    %v357 = vmul.f32 %v233, %v348
    %s358 = scalar_lea.vmem %s4, 64
    %v359 = vld [vmem:[%s358] sm:$0xff]
    %v360 = vld [vmem:[%s358 + $0x8] sm:$0xff]
    %v361 = vld [vmem:[%s358 + $0x10] sm:$0xff]
    %v362 = vld [vmem:[%s358 + $0x18] sm:$0xff]
    %v363 = vld [vmem:[%s358 + $0x20] sm:$0xff]
    %v364 = vld [vmem:[%s358 + $0x28] sm:$0xff]
    %v365 = vld [vmem:[%s358 + $0x30] sm:$0xff]
    %v366 = vld [vmem:[%s358 + $0x38] sm:$0xff]
    %v368 = vsel %vm284, %v359, 0
    %v371 = vsel %vm284, %v360, 0
    %v374 = vsel %vm284, %v361, 0
    %v377 = vsel %vm284, %v362, 0
    %v380 = vsel %vm284, %v363, 0
    %v383 = vsel %vm284, %v364, 0
    %v386 = vsel %vm284, %v365, 0
    %v389 = vsel %vm284, %v366, 0
    %391 = vmatpush.msra.mxu0 0.0
    %392 = vmatpush.msra.mxu0 0.0
    %393 = vmatpush.msra.mxu0 0.0
    %394 = vmatpush.msra.mxu0 0.0
    %395 = vmatpush.msra.mxu0 0.0
    %396 = vmatpush.msra.mxu0 0.0
    %397 = vmatpush.msra.mxu0 0.0
    %398 = vmatpush.msra.mxu0 0.0
    %399 = vmatpush.msra.mxu0 %v274
    %400 = vmatpush.msra.mxu0 %v271
    %401 = vmatpush.msra.mxu0 %v268
    %402 = vmatpush.msra.mxu0 %v265
    %403 = vmatpush.msra.mxu0 %v262
    %404 = vmatpush.msra.mxu0 %v259
    %405 = vmatpush.msra.mxu0 %v256
    %406 = vmatpush.msra.mxu0 %v253
    %407 = vmatmul.f32.gmra.mxu0 %v368
    %v408 = vpop.f32.mrf.mxu0
    %v409 = vadd.f32 0.0, %v408
    %410 = vmatmul.f32.gmra.mxu0 %v371
    %v411 = vpop.f32.mrf.mxu0
    %v412 = vadd.f32 0.0, %v411
    %413 = vmatmul.f32.gmra.mxu0 %v374
    %v414 = vpop.f32.mrf.mxu0
    %v415 = vadd.f32 0.0, %v414
    %416 = vmatmul.f32.gmra.mxu0 %v377
    %v417 = vpop.f32.mrf.mxu0
    %v418 = vadd.f32 0.0, %v417
    %419 = vmatmul.f32.gmra.mxu0 %v380
    %v420 = vpop.f32.mrf.mxu0
    %v421 = vadd.f32 0.0, %v420
    %422 = vmatmul.f32.gmra.mxu0 %v383
    %v423 = vpop.f32.mrf.mxu0
    %v424 = vadd.f32 0.0, %v423
    %425 = vmatmul.f32.gmra.mxu0 %v386
    %v426 = vpop.f32.mrf.mxu0
    %v427 = vadd.f32 0.0, %v426
    %428 = vmatmul.f32.gmra.mxu0 %v389
    %v429 = vpop.f32.mrf.mxu0
    %v430 = vadd.f32 0.0, %v429
    %431 = vdwg.mxu0
    %v432 = vmul.f32 %v212, %v409
    %v433 = vmul.f32 %v215, %v412
    %v434 = vmul.f32 %v218, %v415
    %v435 = vmul.f32 %v221, %v418
    %v436 = vmul.f32 %v224, %v421
    %v437 = vmul.f32 %v227, %v424
    %v438 = vmul.f32 %v230, %v427
    %v439 = vmul.f32 %v233, %v430
    %s440 = scalar_lea.vmem %s4, 128
    %v441 = vld [vmem:[%s440] sm:$0xff]
    %v442 = vld [vmem:[%s440 + $0x8] sm:$0xff]
    %v443 = vld [vmem:[%s440 + $0x10] sm:$0xff]
    %v444 = vld [vmem:[%s440 + $0x18] sm:$0xff]
    %v445 = vld [vmem:[%s440 + $0x20] sm:$0xff]
    %v446 = vld [vmem:[%s440 + $0x28] sm:$0xff]
    %v447 = vld [vmem:[%s440 + $0x30] sm:$0xff]
    %v448 = vld [vmem:[%s440 + $0x38] sm:$0xff]
    %v450 = vsel %vm284, %v441, 0
    %v453 = vsel %vm284, %v442, 0
    %v456 = vsel %vm284, %v443, 0
    %v459 = vsel %vm284, %v444, 0
    %v462 = vsel %vm284, %v445, 0
    %v465 = vsel %vm284, %v446, 0
    %v468 = vsel %vm284, %v447, 0
    %v471 = vsel %vm284, %v448, 0
    %473 = vmatpush.msra.mxu0 0.0
    %474 = vmatpush.msra.mxu0 0.0
    %475 = vmatpush.msra.mxu0 0.0
    %476 = vmatpush.msra.mxu0 0.0
    %477 = vmatpush.msra.mxu0 0.0
    %478 = vmatpush.msra.mxu0 0.0
    %479 = vmatpush.msra.mxu0 0.0
    %480 = vmatpush.msra.mxu0 0.0
    %481 = vmatpush.msra.mxu0 %v274
    %482 = vmatpush.msra.mxu0 %v271
    %483 = vmatpush.msra.mxu0 %v268
    %484 = vmatpush.msra.mxu0 %v265
    %485 = vmatpush.msra.mxu0 %v262
    %486 = vmatpush.msra.mxu0 %v259
    %487 = vmatpush.msra.mxu0 %v256
    %488 = vmatpush.msra.mxu0 %v253
    %489 = vmatmul.f32.gmra.mxu0 %v450
    %v490 = vpop.f32.mrf.mxu0
    %v491 = vadd.f32 0.0, %v490
    %492 = vmatmul.f32.gmra.mxu0 %v453
    %v493 = vpop.f32.mrf.mxu0
    %v494 = vadd.f32 0.0, %v493
    %495 = vmatmul.f32.gmra.mxu0 %v456
    %v496 = vpop.f32.mrf.mxu0
    %v497 = vadd.f32 0.0, %v496
    %498 = vmatmul.f32.gmra.mxu0 %v459
    %v499 = vpop.f32.mrf.mxu0
    %v500 = vadd.f32 0.0, %v499
    %501 = vmatmul.f32.gmra.mxu0 %v462
    %v502 = vpop.f32.mrf.mxu0
    %v503 = vadd.f32 0.0, %v502
    %504 = vmatmul.f32.gmra.mxu0 %v465
    %v505 = vpop.f32.mrf.mxu0
    %v506 = vadd.f32 0.0, %v505
    %507 = vmatmul.f32.gmra.mxu0 %v468
    %v508 = vpop.f32.mrf.mxu0
    %v509 = vadd.f32 0.0, %v508
    %510 = vmatmul.f32.gmra.mxu0 %v471
    %v511 = vpop.f32.mrf.mxu0
    %v512 = vadd.f32 0.0, %v511
    %513 = vdwg.mxu0
    %v514 = vmul.f32 %v212, %v491
    %v515 = vmul.f32 %v215, %v494
    %v516 = vmul.f32 %v218, %v497
    %v517 = vmul.f32 %v221, %v500
    %v518 = vmul.f32 %v224, %v503
    %v519 = vmul.f32 %v227, %v506
    %v520 = vmul.f32 %v230, %v509
    %v521 = vmul.f32 %v233, %v512
    %s522 = scalar_lea.vmem %s4, 192
    %v523 = vld [vmem:[%s522] sm:$0xff]
    %v524 = vld [vmem:[%s522 + $0x8] sm:$0xff]
    %v525 = vld [vmem:[%s522 + $0x10] sm:$0xff]
    %v526 = vld [vmem:[%s522 + $0x18] sm:$0xff]
    %v527 = vld [vmem:[%s522 + $0x20] sm:$0xff]
    %v528 = vld [vmem:[%s522 + $0x28] sm:$0xff]
    %v529 = vld [vmem:[%s522 + $0x30] sm:$0xff]
    %v530 = vld [vmem:[%s522 + $0x38] sm:$0xff]
    %v532 = vsel %vm284, %v523, 0
    %v535 = vsel %vm284, %v524, 0
    %v538 = vsel %vm284, %v525, 0
    %v541 = vsel %vm284, %v526, 0
    %v544 = vsel %vm284, %v527, 0
    %v547 = vsel %vm284, %v528, 0
    %v550 = vsel %vm284, %v529, 0
    %v553 = vsel %vm284, %v530, 0
    %555 = vmatpush.msra.mxu0 0.0
    %556 = vmatpush.msra.mxu0 0.0
    %557 = vmatpush.msra.mxu0 0.0
    %558 = vmatpush.msra.mxu0 0.0
    %559 = vmatpush.msra.mxu0 0.0
    %560 = vmatpush.msra.mxu0 0.0
    %561 = vmatpush.msra.mxu0 0.0
    %562 = vmatpush.msra.mxu0 0.0
    %563 = vmatpush.msra.mxu0 %v274
    %564 = vmatpush.msra.mxu0 %v271
    %565 = vmatpush.msra.mxu0 %v268
    %566 = vmatpush.msra.mxu0 %v265
    %567 = vmatpush.msra.mxu0 %v262
    %568 = vmatpush.msra.mxu0 %v259
    %569 = vmatpush.msra.mxu0 %v256
    %570 = vmatpush.msra.mxu0 %v253
    %571 = vmatmul.f32.gmra.mxu0 %v532
    %v572 = vpop.f32.mrf.mxu0
    %v573 = vadd.f32 0.0, %v572
    %574 = vmatmul.f32.gmra.mxu0 %v535
    %v575 = vpop.f32.mrf.mxu0
    %v576 = vadd.f32 0.0, %v575
    %577 = vmatmul.f32.gmra.mxu0 %v538
    %v578 = vpop.f32.mrf.mxu0
    %v579 = vadd.f32 0.0, %v578
    %580 = vmatmul.f32.gmra.mxu0 %v541
    %v581 = vpop.f32.mrf.mxu0
    %v582 = vadd.f32 0.0, %v581
    %583 = vmatmul.f32.gmra.mxu0 %v544
    %v584 = vpop.f32.mrf.mxu0
    %v585 = vadd.f32 0.0, %v584
    %586 = vmatmul.f32.gmra.mxu0 %v547
    %v587 = vpop.f32.mrf.mxu0
    %v588 = vadd.f32 0.0, %v587
    %589 = vmatmul.f32.gmra.mxu0 %v550
    %v590 = vpop.f32.mrf.mxu0
    %v591 = vadd.f32 0.0, %v590
    %592 = vmatmul.f32.gmra.mxu0 %v553
    %v593 = vpop.f32.mrf.mxu0
    %v594 = vadd.f32 0.0, %v593
    %595 = vdwg.mxu0
    %v596 = vmul.f32 %v212, %v573
    %v597 = vmul.f32 %v215, %v576
    %v598 = vmul.f32 %v218, %v579
    %v599 = vmul.f32 %v221, %v582
    %v600 = vmul.f32 %v224, %v585
    %v601 = vmul.f32 %v227, %v588
    %v602 = vmul.f32 %v230, %v591
    %v603 = vmul.f32 %v233, %v594
    %v604 = vld [vmem:[%s5] sm:$0xff]
    %v605 = vld [vmem:[%s5 + $0x8] sm:$0xff]
    %v606 = vld [vmem:[%s5 + $0x10] sm:$0xff]
    %v607 = vld [vmem:[%s5 + $0x18] sm:$0xff]
    %v608 = vld [vmem:[%s5 + $0x20] sm:$0xff]
    %v609 = vld [vmem:[%s5 + $0x28] sm:$0xff]
    %v610 = vld [vmem:[%s5 + $0x30] sm:$0xff]
    %v611 = vld [vmem:[%s5 + $0x38] sm:$0xff]
    %v612 = vld [vmem:[%s5 + $0x40] sm:$0xff]
    %v613 = vld [vmem:[%s5 + $0x48] sm:$0xff]
    %v614 = vld [vmem:[%s5 + $0x50] sm:$0xff]
    %v615 = vld [vmem:[%s5 + $0x58] sm:$0xff]
    %v616 = vld [vmem:[%s5 + $0x60] sm:$0xff]
    %v617 = vld [vmem:[%s5 + $0x68] sm:$0xff]
    %v618 = vld [vmem:[%s5 + $0x70] sm:$0xff]
    %v619 = vld [vmem:[%s5 + $0x78] sm:$0xff]
    %v620 = vld [vmem:[%s5 + $0x80] sm:$0xff]
    %v621 = vld [vmem:[%s5 + $0x88] sm:$0xff]
    %v622 = vld [vmem:[%s5 + $0x90] sm:$0xff]
    %v623 = vld [vmem:[%s5 + $0x98] sm:$0xff]
    %v624 = vld [vmem:[%s5 + $0xa0] sm:$0xff]
    %v625 = vld [vmem:[%s5 + $0xa8] sm:$0xff]
    %v626 = vld [vmem:[%s5 + $0xb0] sm:$0xff]
    %v627 = vld [vmem:[%s5 + $0xb8] sm:$0xff]
    %v628 = vld [vmem:[%s5 + $0xc0] sm:$0xff]
    %v629 = vld [vmem:[%s5 + $0xc8] sm:$0xff]
    %v630 = vld [vmem:[%s5 + $0xd0] sm:$0xff]
    %v631 = vld [vmem:[%s5 + $0xd8] sm:$0xff]
    %v632 = vld [vmem:[%s5 + $0xe0] sm:$0xff]
    %v633 = vld [vmem:[%s5 + $0xe8] sm:$0xff]
    %v634 = vld [vmem:[%s5 + $0xf0] sm:$0xff]
    %v635 = vld [vmem:[%s5 + $0xf8] sm:$0xff]
    %v636 = vld [vmem:[%s5 + $0x100] sm:$0xff]
    %v637 = vld [vmem:[%s5 + $0x108] sm:$0xff]
    %v638 = vld [vmem:[%s5 + $0x110] sm:$0xff]
    %v639 = vld [vmem:[%s5 + $0x118] sm:$0xff]
    %v640 = vld [vmem:[%s5 + $0x120] sm:$0xff]
    %v641 = vld [vmem:[%s5 + $0x128] sm:$0xff]
    %v642 = vld [vmem:[%s5 + $0x130] sm:$0xff]
    %v643 = vld [vmem:[%s5 + $0x138] sm:$0xff]
    %v644 = vld [vmem:[%s5 + $0x140] sm:$0xff]
    %v645 = vld [vmem:[%s5 + $0x148] sm:$0xff]
    %v646 = vld [vmem:[%s5 + $0x150] sm:$0xff]
    %v647 = vld [vmem:[%s5 + $0x158] sm:$0xff]
    %v648 = vld [vmem:[%s5 + $0x160] sm:$0xff]
    %v649 = vld [vmem:[%s5 + $0x168] sm:$0xff]
    %v650 = vld [vmem:[%s5 + $0x170] sm:$0xff]
    %v651 = vld [vmem:[%s5 + $0x178] sm:$0xff]
    %v652 = vld [vmem:[%s5 + $0x180] sm:$0xff]
    %v653 = vld [vmem:[%s5 + $0x188] sm:$0xff]
    %v654 = vld [vmem:[%s5 + $0x190] sm:$0xff]
    %v655 = vld [vmem:[%s5 + $0x198] sm:$0xff]
    %v656 = vld [vmem:[%s5 + $0x1a0] sm:$0xff]
    %v657 = vld [vmem:[%s5 + $0x1a8] sm:$0xff]
    %v658 = vld [vmem:[%s5 + $0x1b0] sm:$0xff]
    %v659 = vld [vmem:[%s5 + $0x1b8] sm:$0xff]
    %v660 = vld [vmem:[%s5 + $0x1c0] sm:$0xff]
    %v661 = vld [vmem:[%s5 + $0x1c8] sm:$0xff]
    %v662 = vld [vmem:[%s5 + $0x1d0] sm:$0xff]
    %v663 = vld [vmem:[%s5 + $0x1d8] sm:$0xff]
    %v664 = vld [vmem:[%s5 + $0x1e0] sm:$0xff]
    %v665 = vld [vmem:[%s5 + $0x1e8] sm:$0xff]
    %v666 = vld [vmem:[%s5 + $0x1f0] sm:$0xff]
    %v667 = vld [vmem:[%s5 + $0x1f8] sm:$0xff]
    %668 = vmatpush.msra.mxu0 %v619
    %669 = vmatpush.msra.mxu0 %v618
    %670 = vmatpush.msra.mxu0 %v617
    %671 = vmatpush.msra.mxu0 %v616
    %672 = vmatpush.msra.mxu0 %v615
    %673 = vmatpush.msra.mxu0 %v614
    %674 = vmatpush.msra.mxu0 %v613
    %675 = vmatpush.msra.mxu0 %v612
    %676 = vmatpush.msra.mxu0 %v611
    %677 = vmatpush.msra.mxu0 %v610
    %678 = vmatpush.msra.mxu0 %v609
    %679 = vmatpush.msra.mxu0 %v608
    %680 = vmatpush.msra.mxu0 %v607
    %681 = vmatpush.msra.mxu0 %v606
    %682 = vmatpush.msra.mxu0 %v605
    %683 = vmatpush.msra.mxu0 %v604
    %684 = vmatmul.f32.gmra.mxu0 %v350
    %v685 = vpop.f32.mrf.mxu0
    %v686 = vadd.f32 0.0, %v685
    %687 = vmatmul.f32.gmra.mxu0 %v351
    %v688 = vpop.f32.mrf.mxu0
    %v689 = vadd.f32 0.0, %v688
    %690 = vmatmul.f32.gmra.mxu0 %v352
    %v691 = vpop.f32.mrf.mxu0
    %v692 = vadd.f32 0.0, %v691
    %693 = vmatmul.f32.gmra.mxu0 %v353
    %v694 = vpop.f32.mrf.mxu0
    %v695 = vadd.f32 0.0, %v694
    %696 = vmatmul.f32.gmra.mxu0 %v354
    %v697 = vpop.f32.mrf.mxu0
    %v698 = vadd.f32 0.0, %v697
    %699 = vmatmul.f32.gmra.mxu0 %v355
    %v700 = vpop.f32.mrf.mxu0
    %v701 = vadd.f32 0.0, %v700
    %702 = vmatmul.f32.gmra.mxu0 %v356
    %v703 = vpop.f32.mrf.mxu0
    %v704 = vadd.f32 0.0, %v703
    %705 = vmatmul.f32.gmra.mxu0 %v357
    %v706 = vpop.f32.mrf.mxu0
    %v707 = vadd.f32 0.0, %v706
    %708 = vdwg.mxu0
    %709 = vmatpush.msra.mxu0 %v635
    %710 = vmatpush.msra.mxu0 %v634
    %711 = vmatpush.msra.mxu0 %v633
    %712 = vmatpush.msra.mxu0 %v632
    %713 = vmatpush.msra.mxu0 %v631
    %714 = vmatpush.msra.mxu0 %v630
    %715 = vmatpush.msra.mxu0 %v629
    %716 = vmatpush.msra.mxu0 %v628
    %717 = vmatpush.msra.mxu0 %v627
    %718 = vmatpush.msra.mxu0 %v626
    %719 = vmatpush.msra.mxu0 %v625
    %720 = vmatpush.msra.mxu0 %v624
    %721 = vmatpush.msra.mxu0 %v623
    %722 = vmatpush.msra.mxu0 %v622
    %723 = vmatpush.msra.mxu0 %v621
    %724 = vmatpush.msra.mxu0 %v620
    %725 = vmatmul.f32.gmra.mxu0 %v432
    %v726 = vpop.f32.mrf.mxu0
    %v727 = vadd.f32 %v686, %v726
    %728 = vmatmul.f32.gmra.mxu0 %v433
    %v729 = vpop.f32.mrf.mxu0
    %v730 = vadd.f32 %v689, %v729
    %731 = vmatmul.f32.gmra.mxu0 %v434
    %v732 = vpop.f32.mrf.mxu0
    %v733 = vadd.f32 %v692, %v732
    %734 = vmatmul.f32.gmra.mxu0 %v435
    %v735 = vpop.f32.mrf.mxu0
    %v736 = vadd.f32 %v695, %v735
    %737 = vmatmul.f32.gmra.mxu0 %v436
    %v738 = vpop.f32.mrf.mxu0
    %v739 = vadd.f32 %v698, %v738
    %740 = vmatmul.f32.gmra.mxu0 %v437
    %v741 = vpop.f32.mrf.mxu0
    %v742 = vadd.f32 %v701, %v741
    %743 = vmatmul.f32.gmra.mxu0 %v438
    %v744 = vpop.f32.mrf.mxu0
    %v745 = vadd.f32 %v704, %v744
    %746 = vmatmul.f32.gmra.mxu0 %v439
    %v747 = vpop.f32.mrf.mxu0
    %v748 = vadd.f32 %v707, %v747
    %749 = vdwg.mxu0
    %750 = vmatpush.msra.mxu0 %v651
    %751 = vmatpush.msra.mxu0 %v650
    %752 = vmatpush.msra.mxu0 %v649
    %753 = vmatpush.msra.mxu0 %v648
    %754 = vmatpush.msra.mxu0 %v647
    %755 = vmatpush.msra.mxu0 %v646
    %756 = vmatpush.msra.mxu0 %v645
    %757 = vmatpush.msra.mxu0 %v644
    %758 = vmatpush.msra.mxu0 %v643
    %759 = vmatpush.msra.mxu0 %v642
    %760 = vmatpush.msra.mxu0 %v641
    %761 = vmatpush.msra.mxu0 %v640
    %762 = vmatpush.msra.mxu0 %v639
    %763 = vmatpush.msra.mxu0 %v638
    %764 = vmatpush.msra.mxu0 %v637
    %765 = vmatpush.msra.mxu0 %v636
    %766 = vmatmul.f32.gmra.mxu0 %v514
    %v767 = vpop.f32.mrf.mxu0
    %v768 = vadd.f32 %v727, %v767
    %769 = vmatmul.f32.gmra.mxu0 %v515
    %v770 = vpop.f32.mrf.mxu0
    %v771 = vadd.f32 %v730, %v770
    %772 = vmatmul.f32.gmra.mxu0 %v516
    %v773 = vpop.f32.mrf.mxu0
    %v774 = vadd.f32 %v733, %v773
    %775 = vmatmul.f32.gmra.mxu0 %v517
    %v776 = vpop.f32.mrf.mxu0
    %v777 = vadd.f32 %v736, %v776
    %778 = vmatmul.f32.gmra.mxu0 %v518
    %v779 = vpop.f32.mrf.mxu0
    %v780 = vadd.f32 %v739, %v779
    %781 = vmatmul.f32.gmra.mxu0 %v519
    %v782 = vpop.f32.mrf.mxu0
    %v783 = vadd.f32 %v742, %v782
    %784 = vmatmul.f32.gmra.mxu0 %v520
    %v785 = vpop.f32.mrf.mxu0
    %v786 = vadd.f32 %v745, %v785
    %787 = vmatmul.f32.gmra.mxu0 %v521
    %v788 = vpop.f32.mrf.mxu0
    %v789 = vadd.f32 %v748, %v788
    %790 = vdwg.mxu0
    %791 = vmatpush.msra.mxu0 %v667
    %792 = vmatpush.msra.mxu0 %v666
    %793 = vmatpush.msra.mxu0 %v665
    %794 = vmatpush.msra.mxu0 %v664
    %795 = vmatpush.msra.mxu0 %v663
    %796 = vmatpush.msra.mxu0 %v662
    %797 = vmatpush.msra.mxu0 %v661
    %798 = vmatpush.msra.mxu0 %v660
    %799 = vmatpush.msra.mxu0 %v659
    %800 = vmatpush.msra.mxu0 %v658
    %801 = vmatpush.msra.mxu0 %v657
    %802 = vmatpush.msra.mxu0 %v656
    %803 = vmatpush.msra.mxu0 %v655
    %804 = vmatpush.msra.mxu0 %v654
    %805 = vmatpush.msra.mxu0 %v653
    %806 = vmatpush.msra.mxu0 %v652
    %807 = vmatmul.f32.gmra.mxu0 %v596
    %v808 = vpop.f32.mrf.mxu0
    %v809 = vadd.f32 %v768, %v808
    %810 = vmatmul.f32.gmra.mxu0 %v597
    %v811 = vpop.f32.mrf.mxu0
    %v812 = vadd.f32 %v771, %v811
    %813 = vmatmul.f32.gmra.mxu0 %v598
    %v814 = vpop.f32.mrf.mxu0
    %v815 = vadd.f32 %v774, %v814
    %816 = vmatmul.f32.gmra.mxu0 %v599
    %v817 = vpop.f32.mrf.mxu0
    %v818 = vadd.f32 %v777, %v817
    %819 = vmatmul.f32.gmra.mxu0 %v600
    %v820 = vpop.f32.mrf.mxu0
    %v821 = vadd.f32 %v780, %v820
    %822 = vmatmul.f32.gmra.mxu0 %v601
    %v823 = vpop.f32.mrf.mxu0
    %v824 = vadd.f32 %v783, %v823
    %825 = vmatmul.f32.gmra.mxu0 %v602
    %v826 = vpop.f32.mrf.mxu0
    %v827 = vadd.f32 %v786, %v826
    %828 = vmatmul.f32.gmra.mxu0 %v603
    %v829 = vpop.f32.mrf.mxu0
    %v830 = vadd.f32 %v789, %v829
    %831 = vdwg.mxu0
    %v832 = vlaneseq
    %v833 = vshrl.u32 %v832, 7
    %v834 = vadd.s32 %v833, 8
    %v835 = vadd.s32 %v833, 16
    %v836 = vlaneseq
    %v837 = vand.u32 %v836, 127
    %vm838 = vcmp.eq.s32.totalorder %v833, %v837
    %vm839 = vcmp.eq.s32.totalorder %v834, %v837
    %vm840 = vcmp.eq.s32.totalorder %v835, %v837
    %v841 = vsel %vm838, 1, 0
    %v842 = vsel %vm839, 1, 0
    %v843 = vsel %vm840, 1, 0
    %v844 = vcvt.s32.f32 %v841
    %v845 = vcvt.s32.f32 %v842
    %v846 = vcvt.s32.f32 %v843
    %vm847 = vcmask 162816
    %v849 = vsel %vm847, %v809, 0
    %v852 = vsel %vm847, %v812, 0
    %v855 = vsel %vm847, %v815, 0
    %v858 = vsel %vm847, %v818, 0
    %v861 = vsel %vm847, %v821, 0
    %v864 = vsel %vm847, %v824, 0
    %v867 = vsel %vm847, %v827, 0
    %v870 = vsel %vm847, %v830, 0
    %vm872 = vcmask 1043456
    %v874 = vsel %vm872, %v846, 0
    %876 = vmatpush.msra.mxu0 0.0
    %877 = vmatpush.msra.mxu0 0.0
    %878 = vmatpush.msra.mxu0 0.0
    %879 = vmatpush.msra.mxu0 0.0
    %880 = vmatpush.msra.mxu0 0.0
    %881 = vmatpush.msra.mxu0 0.0
    %882 = vmatpush.msra.mxu0 0.0
    %883 = vmatpush.msra.mxu0 0.0
    %884 = vmatpush.msra.mxu0 0.0
    %885 = vmatpush.msra.mxu0 0.0
    %886 = vmatpush.msra.mxu0 0.0
    %887 = vmatpush.msra.mxu0 0.0
    %888 = vmatpush.msra.mxu0 0.0
    %889 = vmatpush.msra.mxu0 %v874
    %890 = vmatpush.msra.mxu0 %v845
    %891 = vmatpush.msra.mxu0 %v844
    %892 = vmatmul.f32.gmra.mxu0 %v849
    %v893 = vpop.f32.mrf.mxu0
    %v894 = vadd.f32 0.0, %v893
    %895 = vmatmul.f32.gmra.mxu0 %v852
    %v896 = vpop.f32.mrf.mxu0
    %v897 = vadd.f32 0.0, %v896
    %898 = vmatmul.f32.gmra.mxu0 %v855
    %v899 = vpop.f32.mrf.mxu0
    %v900 = vadd.f32 0.0, %v899
    %901 = vmatmul.f32.gmra.mxu0 %v858
    %v902 = vpop.f32.mrf.mxu0
    %v903 = vadd.f32 0.0, %v902
    %904 = vmatmul.f32.gmra.mxu0 %v861
    %v905 = vpop.f32.mrf.mxu0
    %v906 = vadd.f32 0.0, %v905
    %907 = vmatmul.f32.gmra.mxu0 %v864
    %v908 = vpop.f32.mrf.mxu0
    %v909 = vadd.f32 0.0, %v908
    %910 = vmatmul.f32.gmra.mxu0 %v867
    %v911 = vpop.f32.mrf.mxu0
    %v912 = vadd.f32 0.0, %v911
    %913 = vmatmul.f32.gmra.mxu0 %v870
    %v914 = vpop.f32.mrf.mxu0
    %v915 = vadd.f32 0.0, %v914
    %916 = vdwg.mxu0
    %vm917 = vcmp.ge.s32.totalorder %v837, 16
    %vm918 = vcmp.lt.s32.totalorder %v837, 20
    %vm919 = vmand %vm917, %vm918
    %v920 = vsel %vm919, %v894, -1e+30
    %v921 = vsel %vm919, %v897, -1e+30
    %v922 = vsel %vm919, %v900, -1e+30
    %v923 = vsel %vm919, %v903, -1e+30
    %v924 = vsel %vm919, %v906, -1e+30
    %v925 = vsel %vm919, %v909, -1e+30
    %v926 = vsel %vm919, %v912, -1e+30
    %v927 = vsel %vm919, %v915, -1e+30
    %928 = vmax.xlane.f32.xlu0 %v920
    %v929 = vpop.xlane.xlu0 %928
    %930 = vmax.xlane.f32.xlu0 %v921
    %v931 = vpop.xlane.xlu0 %930
    %932 = vmax.xlane.f32.xlu0 %v922
    %v933 = vpop.xlane.xlu0 %932
    %934 = vmax.xlane.f32.xlu0 %v923
    %v935 = vpop.xlane.xlu0 %934
    %936 = vmax.xlane.f32.xlu0 %v924
    %v937 = vpop.xlane.xlu0 %936
    %938 = vmax.xlane.f32.xlu0 %v925
    %v939 = vpop.xlane.xlu0 %938
    %940 = vmax.xlane.f32.xlu0 %v926
    %v941 = vpop.xlane.xlu0 %940
    %942 = vmax.xlane.f32.xlu0 %v927
    %v943 = vpop.xlane.xlu0 %942
    %v944 = vsub.f32 %v920, %v929
    %v945 = vsub.f32 %v921, %v931
    %v946 = vsub.f32 %v922, %v933
    %v947 = vsub.f32 %v923, %v935
    %v948 = vsub.f32 %v924, %v937
    %v949 = vsub.f32 %v925, %v939
    %v950 = vsub.f32 %v926, %v941
    %v951 = vsub.f32 %v927, %v943
    %v952 = vmul.f32 %v944, 1.442695
    %v953 = vpow.pop %v952
    %v954 = vmul.f32 %v945, 1.442695
    %v955 = vpow.pop %v954
    %v956 = vmul.f32 %v946, 1.442695
    %v957 = vpow.pop %v956
    %v958 = vmul.f32 %v947, 1.442695
    %v959 = vpow.pop %v958
    %v960 = vmul.f32 %v948, 1.442695
    %v961 = vpow.pop %v960
    %v962 = vmul.f32 %v949, 1.442695
    %v963 = vpow.pop %v962
    %v964 = vmul.f32 %v950, 1.442695
    %v965 = vpow.pop %v964
    %v966 = vmul.f32 %v951, 1.442695
    %v967 = vpow.pop %v966
    %968 = vadd.xlane.f32.xlu0 %v953
    %v969 = vpop.xlane.xlu0 %968
    %970 = vadd.xlane.f32.xlu0 %v955
    %v971 = vpop.xlane.xlu0 %970
    %972 = vadd.xlane.f32.xlu0 %v957
    %v973 = vpop.xlane.xlu0 %972
    %974 = vadd.xlane.f32.xlu0 %v959
    %v975 = vpop.xlane.xlu0 %974
    %976 = vadd.xlane.f32.xlu0 %v961
    %v977 = vpop.xlane.xlu0 %976
    %978 = vadd.xlane.f32.xlu0 %v963
    %v979 = vpop.xlane.xlu0 %978
    %980 = vadd.xlane.f32.xlu0 %v965
    %v981 = vpop.xlane.xlu0 %980
    %982 = vadd.xlane.f32.xlu0 %v967
    %v983 = vpop.xlane.xlu0 %982
    %v984 = vrcp.pop %v969
    %v985 = vmul.f32 %v969, %v984
    %v986 = vsub.f32 1.0, %v985
    %v987 = vmul.f32 %v984, %v986
    %v988 = vadd.f32 %v984, %v987
    %vm989 = vweird.f32 %v969
    %vm990 = vweird.f32 %v984
    %vm991 = vmor %vm989, %vm990
    %v992 = vsel %vm991, %v984, %v988
    %v993 = vand.u32 2147483647, %v969
    %vm994 = vcmp.eq.f32.partialorder %v993, 8.507059e+37
    %v995 = vand.u32 %v969, 2147483648
    %v996 = vor.u32 1.1754944e-38, %v995
    %v997 = vsel %vm994, %v996, %v992
    %v998 = vrcp.pop %v971
    %v999 = vmul.f32 %v971, %v998
    %v1000 = vsub.f32 1.0, %v999
    %v1001 = vmul.f32 %v998, %v1000
    %v1002 = vadd.f32 %v998, %v1001
    %vm1003 = vweird.f32 %v971
    %vm1004 = vweird.f32 %v998
    %vm1005 = vmor %vm1003, %vm1004
    %v1006 = vsel %vm1005, %v998, %v1002
    %v1007 = vand.u32 2147483647, %v971
    %vm1008 = vcmp.eq.f32.partialorder %v1007, 8.507059e+37
    %v1009 = vand.u32 %v971, 2147483648
    %v1010 = vor.u32 1.1754944e-38, %v1009
    %v1011 = vsel %vm1008, %v1010, %v1006
    %v1012 = vrcp.pop %v973
    %v1013 = vmul.f32 %v973, %v1012
    %v1014 = vsub.f32 1.0, %v1013
    %v1015 = vmul.f32 %v1012, %v1014
    %v1016 = vadd.f32 %v1012, %v1015
    %vm1017 = vweird.f32 %v973
    %vm1018 = vweird.f32 %v1012
    %vm1019 = vmor %vm1017, %vm1018
    %v1020 = vsel %vm1019, %v1012, %v1016
    %v1021 = vand.u32 2147483647, %v973
    %vm1022 = vcmp.eq.f32.partialorder %v1021, 8.507059e+37
    %v1023 = vand.u32 %v973, 2147483648
    %v1024 = vor.u32 1.1754944e-38, %v1023
    %v1025 = vsel %vm1022, %v1024, %v1020
    %v1026 = vrcp.pop %v975
    %v1027 = vmul.f32 %v975, %v1026
    %v1028 = vsub.f32 1.0, %v1027
    %v1029 = vmul.f32 %v1026, %v1028
    %v1030 = vadd.f32 %v1026, %v1029
    %vm1031 = vweird.f32 %v975
    %vm1032 = vweird.f32 %v1026
    %vm1033 = vmor %vm1031, %vm1032
    %v1034 = vsel %vm1033, %v1026, %v1030
    %v1035 = vand.u32 2147483647, %v975
    %vm1036 = vcmp.eq.f32.partialorder %v1035, 8.507059e+37
    %v1037 = vand.u32 %v975, 2147483648
    %v1038 = vor.u32 1.1754944e-38, %v1037
    %v1039 = vsel %vm1036, %v1038, %v1034
    %v1040 = vrcp.pop %v977
    %v1041 = vmul.f32 %v977, %v1040
    %v1042 = vsub.f32 1.0, %v1041
    %v1043 = vmul.f32 %v1040, %v1042
    %v1044 = vadd.f32 %v1040, %v1043
    %vm1045 = vweird.f32 %v977
    %vm1046 = vweird.f32 %v1040
    %vm1047 = vmor %vm1045, %vm1046
    %v1048 = vsel %vm1047, %v1040, %v1044
    %v1049 = vand.u32 2147483647, %v977
    %vm1050 = vcmp.eq.f32.partialorder %v1049, 8.507059e+37
    %v1051 = vand.u32 %v977, 2147483648
    %v1052 = vor.u32 1.1754944e-38, %v1051
    %v1053 = vsel %vm1050, %v1052, %v1048
    %v1054 = vrcp.pop %v979
    %v1055 = vmul.f32 %v979, %v1054
    %v1056 = vsub.f32 1.0, %v1055
    %v1057 = vmul.f32 %v1054, %v1056
    %v1058 = vadd.f32 %v1054, %v1057
    %vm1059 = vweird.f32 %v979
    %vm1060 = vweird.f32 %v1054
    %vm1061 = vmor %vm1059, %vm1060
    %v1062 = vsel %vm1061, %v1054, %v1058
    %v1063 = vand.u32 2147483647, %v979
    %vm1064 = vcmp.eq.f32.partialorder %v1063, 8.507059e+37
    %v1065 = vand.u32 %v979, 2147483648
    %v1066 = vor.u32 1.1754944e-38, %v1065
    %v1067 = vsel %vm1064, %v1066, %v1062
    %v1068 = vrcp.pop %v981
    %v1069 = vmul.f32 %v981, %v1068
    %v1070 = vsub.f32 1.0, %v1069
    %v1071 = vmul.f32 %v1068, %v1070
    %v1072 = vadd.f32 %v1068, %v1071
    %vm1073 = vweird.f32 %v981
    %vm1074 = vweird.f32 %v1068
    %vm1075 = vmor %vm1073, %vm1074
    %v1076 = vsel %vm1075, %v1068, %v1072
    %v1077 = vand.u32 2147483647, %v981
    %vm1078 = vcmp.eq.f32.partialorder %v1077, 8.507059e+37
    %v1079 = vand.u32 %v981, 2147483648
    %v1080 = vor.u32 1.1754944e-38, %v1079
    %v1081 = vsel %vm1078, %v1080, %v1076
    %v1082 = vrcp.pop %v983
    %v1083 = vmul.f32 %v983, %v1082
    %v1084 = vsub.f32 1.0, %v1083
    %v1085 = vmul.f32 %v1082, %v1084
    %v1086 = vadd.f32 %v1082, %v1085
    %vm1087 = vweird.f32 %v983
    %vm1088 = vweird.f32 %v1082
    %vm1089 = vmor %vm1087, %vm1088
    %v1090 = vsel %vm1089, %v1082, %v1086
    %v1091 = vand.u32 2147483647, %v983
    %vm1092 = vcmp.eq.f32.partialorder %v1091, 8.507059e+37
    %v1093 = vand.u32 %v983, 2147483648
    %v1094 = vor.u32 1.1754944e-38, %v1093
    %v1095 = vsel %vm1092, %v1094, %v1090
    %v1096 = vmul.f32 %v953, %v997
    %v1097 = vmul.f32 %v955, %v1011
    %v1098 = vmul.f32 %v957, %v1025
    %v1099 = vmul.f32 %v959, %v1039
    %v1100 = vmul.f32 %v961, %v1053
    %v1101 = vmul.f32 %v963, %v1067
    %v1102 = vmul.f32 %v965, %v1081
    %v1103 = vmul.f32 %v967, %v1095
    %v1104 = vsel %vm919, %v1096, %v894
    %v1105 = vsel %vm919, %v1097, %v897
    %v1106 = vsel %vm919, %v1098, %v900
    %v1107 = vsel %vm919, %v1099, %v903
    %v1108 = vsel %vm919, %v1100, %v906
    %v1109 = vsel %vm919, %v1101, %v909
    %v1110 = vsel %vm919, %v1102, %v912
    %v1111 = vsel %vm919, %v1103, %v915
    %1112 = vst [vmem:[#allocation2] sm:$0xff] %v1104
    %1113 = vst [vmem:[#allocation2 + $0x8] sm:$0xff] %v1105
    %1114 = vst [vmem:[#allocation2 + $0x10] sm:$0xff] %v1106
    %1115 = vst [vmem:[#allocation2 + $0x18] sm:$0xff] %v1107
    %1116 = vst [vmem:[#allocation2 + $0x20] sm:$0xff] %v1108
    %1117 = vst [vmem:[#allocation2 + $0x28] sm:$0xff] %v1109
    %1118 = vst [vmem:[#allocation2 + $0x30] sm:$0xff] %v1110
    %1119 = vst [vmem:[#allocation2 + $0x38] sm:$0xff] %v1111
    // Predicated region
    $region26: #{tpu_custom_call.1} parent=1 // pred_check
      _
    $region27: #{tpu_custom_call.1} parent=1 // pred_check_branch
      %1121 = sbr.rel (0) target = $region29
    $region28: #{tpu_custom_call.1} parent=1 // pred_region
      %1123 = vsyncadd [#allocation3], 0
      %s1124 = sshll.u32 [#allocation2], 4
      %s1125 = int_to_ptr.vmem [resolvable:$true] %s1124
      %s1126 = sshll.u32 %s6, 4
      %s1127 = int_to_ptr.hbm [resolvable:$true] %s1126
      %1132 = dma.vmem_to_hbm [thread:$0]  %s1125, 1024, %s1127, [#allocation3], 128, 128, 8
    $region29: #{tpu_custom_call.1} parent=1 // pred_fallthru
      _
    // Predicated region
    $region30: #{tpu_custom_call.1} parent=1 // pred_check
      _
    $region31: #{tpu_custom_call.1} parent=1 // pred_check_branch
      %1134 = sbr.rel (0) target = $region33
    $region32: #{tpu_custom_call.1} parent=1 // pred_region
      %1136 = dma.done [#allocation3], 1024
    $region33: #{tpu_custom_call.1} parent=1 // pred_fallthru
      _
    %1137 = vsyncpa [#allocation3], 1

</llo_original>
